<compile_context>
chip_gen: v7x
topology: tpu7x:2x2x1
jax: 0.10.0
libtpu: 0.0.40
codegen_flags: <defaults>
</compile_context>

<pallas_src>
import itertools

import jax
import jax.numpy as jnp
from jax.experimental import pallas as pl
from jax.experimental.pallas import tpu as pltpu

EPS = 1e-5
OFFSETS = tuple(itertools.product((-1, 0, 1), repeat=3))   # 3x3x3 kernel -> K = 27


# ----------------------------- Pallas kernels -----------------------------

def _conv_stats_kernel(g_ref, wt_ref, gmt_ref, bidx_ref, conv_ref, stats_ref):
    """Fused sparse conv (one big bf16 matmul) + merged per-tile GroupNorm stats.

    g_ref    : [27*C, T] bf16  gathered neighbor features (points on lanes)
    wt_ref   : [C, 27*C] bf16  fused conv weight, transposed (VMEM-resident)
    gmt_ref  : [G, C]    f32   channel -> group one-hot, transposed (resident)
    bidx_ref : [1, T]    int32 per-point batch index (== B for padded points)
    conv_ref : [C, T]    bf16  conv output tile
    stats_ref: [1, B, 2G] f32  per-(sample, group) partial [sum | sumsq]
    """
    acc = jnp.dot(wt_ref[...], g_ref[...],
                  preferred_element_type=jnp.float32)                 # [C, T] MXU, f32 acc
    conv_ref[...] = acc.astype(conv_ref.dtype)

    nb = stats_ref.shape[1]
    t = acc.shape[1]
    onehot = (jax.lax.broadcasted_iota(jnp.int32, (nb, t), 0)
              == bidx_ref[...]).astype(jnp.float32)                   # [B, T] (padded cols -> 0)
    gm = gmt_ref[...]                                                  # [G, C]
    gboth = jnp.concatenate(
        [jnp.dot(gm, acc, preferred_element_type=jnp.float32),
         jnp.dot(gm, acc * acc, preferred_element_type=jnp.float32)],
        axis=0)                                                        # [2G, T]
    dn = (((1,), (1,)), ((), ()))                                      # contract points axis
    stats_ref[0] = jax.lax.dot_general(onehot, gboth, dn,
                                       preferred_element_type=jnp.float32)       # [B, 2G]


def _gn_relu_body(conv_ref, sb_ref, bidx_ref):
    """Folded GroupNorm affine (y = x*a + b, a/b per (sample, channel)) + ReLU, in f32."""
    c = conv_ref.shape[0]
    nb = sb_ref.shape[1]
    t = conv_ref.shape[1]
    onehot = (jax.lax.broadcasted_iota(jnp.int32, (nb, t), 0)
              == bidx_ref[...]).astype(jnp.float32)                   # [B, T]
    sb = jnp.dot(sb_ref[...], onehot, preferred_element_type=jnp.float32)  # [2C, T]
    x = conv_ref[...].astype(jnp.float32)
    return jnp.maximum(x * sb[:c] + sb[c:], 0.0)


def _gn_relu_kernel(conv_ref, sb_ref, bidx_ref, out_ref):
    out_ref[...] = _gn_relu_body(conv_ref, sb_ref, bidx_ref).astype(out_ref.dtype)


def _gn_relu_res_kernel(conv_ref, sb_ref, bidx_ref, res_ref, out_ref):
    out_ref[...] = (res_ref[...]
                    + _gn_relu_body(conv_ref, sb_ref, bidx_ref)).astype(out_ref.dtype)


# ----------------------------- pallas_call wrappers -----------------------------

def _conv_stats_call(g_t, w_t, gmat_t, bidx_row, num_batches, num_groups,
                     tile_n, vmem_limit):
    kc, n_pad = g_t.shape
    c = w_t.shape[0]
    num_tiles = n_pad // tile_n
    return pl.pallas_call(
        _conv_stats_kernel,
        out_shape=(
            jax.ShapeDtypeStruct((c, n_pad), jnp.bfloat16),
            jax.ShapeDtypeStruct((num_tiles, num_batches, 2 * num_groups), jnp.float32),
        ),
        grid=(num_tiles,),
        in_specs=[
            pl.BlockSpec((kc, tile_n), lambda t: (0, t)),            # streamed gathered tile
            pl.BlockSpec((c, kc), lambda t: (0, 0)),                 # fused weight (resident)
            pl.BlockSpec((num_groups, c), lambda t: (0, 0)),         # group matrix (resident)
            pl.BlockSpec((1, tile_n), lambda t: (0, t)),             # batch-index row
        ],
        out_specs=(
            pl.BlockSpec((c, tile_n), lambda t: (0, t)),
            pl.BlockSpec((1, num_batches, 2 * num_groups), lambda t: (t, 0, 0)),
        ),
        compiler_params=pltpu.CompilerParams(
            dimension_semantics=("parallel",),                       # megacore sharding
            vmem_limit_bytes=vmem_limit),
    )(g_t, w_t, gmat_t, bidx_row)


def _gn_relu_call(conv_t, sb_t, bidx_row, tile_n, vmem_limit, out_dtype,
                  residual_t=None):
    c, n_pad = conv_t.shape
    nb = sb_t.shape[1]
    num_tiles = n_pad // tile_n
    args = [conv_t, sb_t, bidx_row]
    in_specs = [
        pl.BlockSpec((c, tile_n), lambda t: (0, t)),
        pl.BlockSpec((2 * c, nb), lambda t: (0, 0)),                 # stacked scale|bias (resident)
        pl.BlockSpec((1, tile_n), lambda t: (0, t)),
    ]
    kernel = _gn_relu_kernel
    aliases = {}
    if residual_t is not None:
        args.append(residual_t)
        in_specs.append(pl.BlockSpec((c, tile_n), lambda t: (0, t)))
        kernel = _gn_relu_res_kernel
        aliases = {3: 0}                                             # write in place over residual
    return pl.pallas_call(
        kernel,
        out_shape=jax.ShapeDtypeStruct((c, n_pad), out_dtype),
        grid=(num_tiles,),
        in_specs=in_specs,
        out_specs=pl.BlockSpec((c, tile_n), lambda t: (0, t)),
        input_output_aliases=aliases,
        compiler_params=pltpu.CompilerParams(
            dimension_semantics=("parallel",),
            vmem_limit_bytes=vmem_limit),
    )(*args)


# ----------------------------- JAX glue (kernel map / gather) -----------------------------

def _encode(coords):
    # NOTE: assumes batch index and (coord + 1) each fit in 6 bits (grids up to 62^3);
    # larger grids need a wider encoding.
    b = coords[:, 0]
    x = coords[:, 1] + 1
    y = coords[:, 2] + 1
    z = coords[:, 3] + 1
    return ((b * 64 + x) * 64 + y) * 64 + z


def _neighbor_index_table(coords):
    """[N, 27] int32 kernel map: row index of voxel at coord+offset, N if absent.
    One sort + 27 binary searches (O(27 N log N))."""
    n = coords.shape[0]
    keys = _encode(coords)
    order = jnp.argsort(keys)
    skeys = keys[order]
    cols = []
    for off in OFFSETS:
        shift = jnp.array([0, off[0], off[1], off[2]], jnp.int32)
        tkeys = _encode(coords + shift[None, :])
        pos = jnp.clip(jnp.searchsorted(skeys, tkeys), 0, n - 1)
        found = skeys[pos] == tkeys
        cols.append(jnp.where(found, order[pos], n))
    return jnp.stack(cols, axis=1).astype(jnp.int32)


def _round_up(x, m):
    return ((x + m - 1) // m) * m


def _vmem_capacity_bytes():
    try:
        return int(pltpu.get_tpu_info().vmem_capacity_bytes)
    except Exception:
        return 64 * 1024 * 1024   # conservative fallback (v7x per-core VMEM)


def _pick_tiling(n, c, kc, nb, g, vmem_cap):
    """Generation-aware (vmem_limit_bytes, tile_n)."""
    big_vmem = vmem_cap > 96 * 1024 * 1024                 # v5e/v6e: 128 MiB; v7x: 64 MiB
    vmem_limit = (96 if big_vmem else 48) * 1024 * 1024
    budget = (40 if big_vmem else 12) * 1024 * 1024
    # Resident operands (double-buffered by the pipeline even when constant).
    resident = (2 * (c * kc * 2)            # fused weight bf16
                + g * c * 4                 # group matrix f32
                + 2 * (2 * c * nb * 4)      # stacked GN scale|bias f32
                + 2 * (nb * 2 * g * 4))     # stats tile
    # Per point-column streamed bytes (double buffered): gathered bf16 + conv bf16
    # (written then re-read) + residual f32 + out f32 + batch-index row.
    per_col = 2 * (kc * 2 + 2 * (c * 2) + c * 4 + c * 4 + 4)
    tile = 2048
    while tile > 256 and resident + tile * per_col > budget:
        tile //= 2
    n128 = _round_up(max(n, 1), 128)
    if not big_vmem and n128 >= 256:
        # v7x: keep >= 2 tiles so ("parallel",) can shard across both TensorCores.
        tile = min(tile, _round_up(-(-n128 // 2), 128))
    tile = max(min(tile, n128), 128)
    return vmem_limit, tile


def res_block_sparse(feats, coords, params, num_batches, num_groups=8):
    """x + block1(block0(x)) with block = sparse Conv3d(3^3, no bias) -> GroupNorm -> ReLU."""
    n, c = feats.shape
    g_groups = min(num_groups, c)
    assert c % g_groups == 0, "GroupNorm requires num_groups to divide channels"
    cg = c // g_groups
    k = len(OFFSETS)
    kc = k * c
    nb = num_batches

    vmem_limit, tile_n = _pick_tiling(n, c, kc, nb, g_groups, _vmem_capacity_bytes())
    num_tiles = -(-n // tile_n)
    n_pad = num_tiles * tile_n

    batch_idx = coords[:, 0].astype(jnp.int32)
    counts = jnp.sum(jax.nn.one_hot(batch_idx, nb, dtype=jnp.float32), axis=0)    # [B]
    bidx_row = jnp.concatenate(
        [batch_idx, jnp.full((n_pad - n,), nb, jnp.int32)])[None, :]              # [1, N_pad]
    gmat_t = jax.nn.one_hot(jnp.arange(c) // cg, g_groups, dtype=jnp.float32).T   # [G, C]

    # Neighbor table: missing neighbor -> index n (the appended zero column).
    nbr_idx = _neighbor_index_table(coords)                                       # [N, 27]
    nbr_idx_t = jnp.pad(nbr_idx, ((0, n_pad - n), (0, 0)),
                        constant_values=n).T                                      # [27, N_pad]

    # Fused weight with contraction rows ordered (c_in-major, offset-minor) to match the
    # transposed-table gather layout: W_f[ci*27+k, co] = w[k, ci, co].
    w0_t = params["w0"].transpose(1, 0, 2).reshape(kc, c).T.astype(jnp.bfloat16)  # [C, 27*C]
    w1_t = params["w1"].transpose(1, 0, 2).reshape(kc, c).T.astype(jnp.bfloat16)

    feats_t = feats.T                                                             # one transpose total
    zcol_bf = jnp.zeros((c, 1), jnp.bfloat16)

    def run_block(table_ct, w_t, gamma, beta, out_dtype, residual_t=None):
        # table_ct: [C, N+1] bf16 with a zero column at index n.  Gather along lanes,
        # already in [27*C, N_pad] order -> no post-gather transpose.
        g_t = jnp.take(table_ct, nbr_idx_t, axis=1).reshape(kc, n_pad)
        conv_t, stats = _conv_stats_call(g_t, w_t, gmat_t, bidx_row,
                                         nb, g_groups, tile_n, vmem_limit)
        # Finalize GroupNorm stats (tiny [B, 2G]) and fold the affine.
        psum = jnp.sum(stats[..., :g_groups], axis=0)                             # [B, G]
        psq = jnp.sum(stats[..., g_groups:], axis=0)                              # [B, G]
        denom = jnp.maximum(counts[:, None] * cg, 1.0)
        mean = psum / denom
        var = jnp.maximum(psq / denom - mean * mean, 0.0)                         # clamp >= 0
        inv = jax.lax.rsqrt(var + EPS)
        scale_bc = jnp.repeat(inv, cg, axis=1) * gamma                            # [B, C]
        bias_bc = beta - jnp.repeat(mean, cg, axis=1) * scale_bc                  # [B, C]
        sb_t = jnp.concatenate([scale_bc.T, bias_bc.T], axis=0)                   # [2C, B]
        return _gn_relu_call(conv_t, sb_t, bidx_row, tile_n, vmem_limit,
                             out_dtype, residual_t=residual_t)                    # [C, N_pad]

    table0 = jnp.concatenate([feats_t.astype(jnp.bfloat16), zcol_bf], axis=1)     # [C, N+1]
    h_t = run_block(table0, w0_t, params["gamma0"], params["beta0"],
                    jnp.bfloat16)                                                 # bf16 [C, N_pad]

    table1 = jnp.concatenate([h_t[:, :n], zcol_bf], axis=1)                       # [C, N+1]
    res_t = jnp.pad(feats_t, ((0, 0), (0, n_pad - n)))                            # f32 [C, N_pad]
    out_t = run_block(table1, w1_t, params["gamma1"], params["beta1"],
                      jnp.float32, residual_t=res_t)
    return out_t[:, :n].T


# ----------------------------- pure-JAX reference for validation -----------------------------

def _sparse_conv_ref(feats, coords, w):
    keys = _encode(coords)
    n = feats.shape[0]
    out = jnp.zeros((n, w.shape[2]), jnp.float32)
    for k, off in enumerate(OFFSETS):
        shift = jnp.array([0, off[0], off[1], off[2]], jnp.int32)
        tkeys = _encode(coords + shift[None, :])
        eq = tkeys[:, None] == keys[None, :]
        found = jnp.any(eq, axis=1)
        idx = jnp.argmax(eq, axis=1)
        nbv = jnp.where(found[:, None], feats[idx], 0.0)
        out = out + nbv @ w[k]
    return out


def _group_norm_ref(x, batch_idx, num_batches, g_groups, gamma, beta):
    n, c = x.shape
    cg = c // g_groups
    out = jnp.zeros_like(x)
    for b in range(num_batches):
        sel = jnp.where(batch_idx == b)[0]
        xg = x[sel].reshape(-1, g_groups, cg)
        mean = xg.mean(axis=(0, 2), keepdims=True)
        var = ((xg - mean) ** 2).mean(axis=(0, 2), keepdims=True)
        yb = (xg - mean) / jnp.sqrt(var + EPS)
        yb = yb.reshape(-1, c) * gamma + beta
        out = out.at[sel].set(yb)
    return out


def _res_block_ref(feats, coords, params, num_batches, num_groups=8):
    c = feats.shape[1]
    g_groups = min(num_groups, c)
    bidx = coords[:, 0]
    h = _sparse_conv_ref(feats, coords, params["w0"])
    h = jnp.maximum(_group_norm_ref(h, bidx, num_batches, g_groups,
                                    params["gamma0"], params["beta0"]), 0.0)
    o = _sparse_conv_ref(h, coords, params["w1"])
    o = jnp.maximum(_group_norm_ref(o, bidx, num_batches, g_groups,
                                    params["gamma1"], params["beta1"]), 0.0)
    return feats + o


# ----------------------------- main -----------------------------

if __name__ == "__main__":
    key = jax.random.PRNGKey(0)
    kc_, kf, kw0, kw1, kg0, kb0, kg1, kb1 = jax.random.split(key, 8)

    C = 16            # channels
    B = 2             # sparse samples in the batch
    PTS = 24          # points per sample (unique voxels on a 4^3 grid)
    K = len(OFFSETS)  # 27

    grid_xyz = jnp.array(list(itertools.product(range(4), repeat=3)), dtype=jnp.int32)
    coords_list = []
    for b in range(B):
        perm = jax.random.permutation(jax.random.fold_in(kc_, b), grid_xyz.shape[0])[:PTS]
        xyz = grid_xyz[perm]
        bcol = jnp.full((PTS, 1), b, dtype=jnp.int32)
        coords_list.append(jnp.concatenate([bcol, xyz], axis=1))
    coords = jnp.concatenate(coords_list, axis=0)          # [N, 4]
    N = coords.shape[0]

    feats = jax.random.normal(kf, (N, C), dtype=jnp.float32)

    scale = 1.0 / (K * C) ** 0.5
    params = {
        "w0": jax.random.normal(kw0, (K, C, C), jnp.float32) * scale,       # spnn.Conv3d weight
        "w1": jax.random.normal(kw1, (K, C, C), jnp.float32) * scale,
        "gamma0": 1.0 + 0.1 * jax.random.normal(kg0, (1, C), jnp.float32),  # GroupNorm affine
        "beta0": 0.1 * jax.random.normal(kb0, (1, C), jnp.float32),
        "gamma1": 1.0 + 0.1 * jax.random.normal(kg1, (1, C), jnp.float32),
        "beta1": 0.1 * jax.random.normal(kb1, (1, C), jnp.float32),
    }

    fwd = jax.jit(lambda f, cds: res_block_sparse(f, cds, params,
                                                  num_batches=B, num_groups=8))
    out = jax.block_until_ready(fwd(feats, coords))

    ref = _res_block_ref(feats, coords, params, num_batches=B, num_groups=8)
    assert out.shape == (N, C)
    max_err = float(jnp.max(jnp.abs(out - ref)))
    assert jnp.allclose(out, ref, atol=5e-2, rtol=5e-2), f"max abs err {max_err}"

    print("KERNEL_OK")
</pallas_src>

<mosaic_0001>
module attributes {stable_mosaic.version = 11 : i64} {
  func.func @_conv_stats_kernel(%arg0: i32, %arg1: memref<432x128xbf16, #tpu.memory_space<vmem>>, %arg2: memref<16x432xbf16, #tpu.memory_space<vmem>>, %arg3: memref<8x16xf32, #tpu.memory_space<vmem>>, %arg4: memref<1x128xi32, #tpu.memory_space<vmem>>, %arg5: memref<16x128xbf16, #tpu.memory_space<vmem>>, %arg6: memref<1x2x16xf32, #tpu.memory_space<vmem>>) attributes {dimension_semantics = [#tpu.dimension_semantics<parallel>], iteration_bounds = array<i64: 1>, scalar_prefetch = 0 : i64, scratch_operands = 0 : i64, tpu.core_type = #tpu.core_type<tc>, window_params = [{transform_indices = @transform_0, window_bounds = array<i64: 432, 128>}, {pipeline_mode = #tpu.pipeline_mode<synchronous>, transform_indices = @transform_1, window_bounds = array<i64: 16, 432>}, {pipeline_mode = #tpu.pipeline_mode<synchronous>, transform_indices = @transform_2, window_bounds = array<i64: 8, 16>}, {transform_indices = @transform_3, window_bounds = array<i64: 1, 128>}, {transform_indices = @transform_4, window_bounds = array<i64: 16, 128>}, {transform_indices = @transform_5, window_bounds = array<i64: 1, 2, 16>}]} {
    %c0 = arith.constant 0 : index
    %c0_0 = arith.constant 0 : index
    %0 = vector.load %arg2[%c0, %c0_0] : memref<16x432xbf16, #tpu.memory_space<vmem>>, vector<16x432xbf16>
    %c0_1 = arith.constant 0 : index
    %c0_2 = arith.constant 0 : index
    %1 = vector.load %arg1[%c0_1, %c0_2] : memref<432x128xbf16, #tpu.memory_space<vmem>>, vector<432x128xbf16>
    %cst = arith.constant dense<0.000000e+00> : vector<16x128xf32>
    %2 = tpu.matmul %0, %1, %cst {dimension_numbers = #tpu.dot_dimension_numbers<[1], [0], [0], [1], [0, 0, 1, 1], [], []>} : vector<16x432xbf16>, vector<432x128xbf16>, vector<16x128xf32> -> vector<16x128xf32>
    %3 = arith.truncf %2 : vector<16x128xf32> to vector<16x128xbf16>
    %c0_3 = arith.constant 0 : index
    %c0_4 = arith.constant 0 : index
    %4 = vector.load %arg5[%c0_3, %c0_4] : memref<16x128xbf16, #tpu.memory_space<vmem>>, vector<16x128xbf16>
    tpu.vector_store %arg5[%c0_3, %c0_4], %3 {strides = array<i32>} : memref<16x128xbf16, #tpu.memory_space<vmem>>, vector<16x128xbf16>,
    %5 = tpu.iota {dimensions = array<i32: 0>} : vector<2x128xi32>
    %c0_5 = arith.constant 0 : index
    %c0_6 = arith.constant 0 : index
    %6 = vector.load %arg4[%c0_5, %c0_6] : memref<1x128xi32, #tpu.memory_space<vmem>>, vector<1x128xi32>
    %7 = vector.broadcast %6 : vector<1x128xi32> to vector<2x128xi32>
    %8 = arith.cmpi eq, %5, %7 : vector<2x128xi32>
    %9 = arith.extui %8 : vector<2x128xi1> to vector<2x128xi32>
    %10 = arith.sitofp %9 : vector<2x128xi32> to vector<2x128xf32>
    %c0_7 = arith.constant 0 : index
    %c0_8 = arith.constant 0 : index
    %11 = vector.load %arg3[%c0_7, %c0_8] : memref<8x16xf32, #tpu.memory_space<vmem>>, vector<8x16xf32>
    %cst_9 = arith.constant dense<0.000000e+00> : vector<8x128xf32>
    %12 = tpu.matmul %11, %2, %cst_9 {dimension_numbers = #tpu.dot_dimension_numbers<[1], [0], [0], [1], [0, 0, 1, 1], [], []>} : vector<8x16xf32>, vector<16x128xf32>, vector<8x128xf32> -> vector<8x128xf32>
    %13 = arith.mulf %2, %2 : vector<16x128xf32>
    %cst_10 = arith.constant dense<0.000000e+00> : vector<8x128xf32>
    %14 = tpu.matmul %11, %13, %cst_10 {dimension_numbers = #tpu.dot_dimension_numbers<[1], [0], [0], [1], [0, 0, 1, 1], [], []>} : vector<8x16xf32>, vector<16x128xf32>, vector<8x128xf32> -> vector<8x128xf32>
    %15 = tpu.concatenate %12, %14 in 0 : vector<8x128xf32>, vector<8x128xf32> -> vector<16x128xf32>
    %cst_11 = arith.constant dense<0.000000e+00> : vector<2x16xf32>
    %16 = tpu.matmul %10, %15, %cst_11 {dimension_numbers = #tpu.dot_dimension_numbers<[1], [1], [0], [0], [0, 0, 1, 0], [], []>} : vector<2x128xf32>, vector<16x128xf32>, vector<2x16xf32> -> vector<2x16xf32>
    %c0_12 = arith.constant 0 : index
    %c0_13 = arith.constant 0 : index
    %c0_14 = arith.constant 0 : index
    %17 = vector.load %arg6[%c0_12, %c0_13, %c0_14] : memref<1x2x16xf32, #tpu.memory_space<vmem>>, vector<1x2x16xf32>
    %18 = vector.shape_cast %17 : vector<1x2x16xf32> to vector<2x16xf32>
    %19 = vector.shape_cast %16 : vector<2x16xf32> to vector<1x2x16xf32>
    tpu.vector_store %arg6[%c0_12, %c0_13, %c0_14], %19 {strides = array<i32>} : memref<1x2x16xf32, #tpu.memory_space<vmem>>, vector<1x2x16xf32>,
    return
  }
  func.func @transform_0(%arg0: i32) -> (i32, i32) {
    %c0_i32 = arith.constant 0 : i32
    %c0_i32_0 = arith.constant 0 : i32
    return %c0_i32, %arg0 : i32, i32
  }
  func.func @transform_1(%arg0: i32) -> (i32, i32) {
    %c0_i32 = arith.constant 0 : i32
    %c0_i32_0 = arith.constant 0 : i32
    %c0_i32_1 = arith.constant 0 : i32
    return %c0_i32, %c0_i32_0 : i32, i32
  }
  func.func @transform_2(%arg0: i32) -> (i32, i32) {
    %c0_i32 = arith.constant 0 : i32
    %c0_i32_0 = arith.constant 0 : i32
    %c0_i32_1 = arith.constant 0 : i32
    return %c0_i32, %c0_i32_0 : i32, i32
  }
  func.func @transform_3(%arg0: i32) -> (i32, i32) {
    %c0_i32 = arith.constant 0 : i32
    %c0_i32_0 = arith.constant 0 : i32
    return %c0_i32, %arg0 : i32, i32
  }
  func.func @transform_4(%arg0: i32) -> (i32, i32) {
    %c0_i32 = arith.constant 0 : i32
    %c0_i32_0 = arith.constant 0 : i32
    return %c0_i32, %arg0 : i32, i32
  }
  func.func @transform_5(%arg0: i32) -> (i32, i32, i32) {
    %c0_i32 = arith.constant 0 : i32
    %c0_i32_0 = arith.constant 0 : i32
    %c0_i32_1 = arith.constant 0 : i32
    return %arg0, %c0_i32, %c0_i32_0 : i32, i32, i32
  }
}

module attributes {stable_mosaic.version = 11 : i64} {
  func.func @_gn_relu_kernel(%arg0: i32, %arg1: memref<16x128xbf16, #tpu.memory_space<vmem>>, %arg2: memref<32x2xf32, #tpu.memory_space<vmem>>, %arg3: memref<1x128xi32, #tpu.memory_space<vmem>>, %arg4: memref<16x128xbf16, #tpu.memory_space<vmem>>) attributes {dimension_semantics = [#tpu.dimension_semantics<parallel>], iteration_bounds = array<i64: 1>, scalar_prefetch = 0 : i64, scratch_operands = 0 : i64, tpu.core_type = #tpu.core_type<tc>, window_params = [{transform_indices = @transform_0, window_bounds = array<i64: 16, 128>}, {pipeline_mode = #tpu.pipeline_mode<synchronous>, transform_indices = @transform_1, window_bounds = array<i64: 32, 2>}, {transform_indices = @transform_2, window_bounds = array<i64: 1, 128>}, {transform_indices = @transform_3, window_bounds = array<i64: 16, 128>}]} {
    %0 = tpu.iota {dimensions = array<i32: 0>} : vector<2x128xi32>
    %c0 = arith.constant 0 : index
    %c0_0 = arith.constant 0 : index
    %1 = vector.load %arg3[%c0, %c0_0] : memref<1x128xi32, #tpu.memory_space<vmem>>, vector<1x128xi32>
    %2 = vector.broadcast %1 : vector<1x128xi32> to vector<2x128xi32>
    %3 = arith.cmpi eq, %0, %2 : vector<2x128xi32>
    %4 = arith.extui %3 : vector<2x128xi1> to vector<2x128xi32>
    %5 = arith.sitofp %4 : vector<2x128xi32> to vector<2x128xf32>
    %c0_1 = arith.constant 0 : index
    %c0_2 = arith.constant 0 : index
    %6 = vector.load %arg2[%c0_1, %c0_2] : memref<32x2xf32, #tpu.memory_space<vmem>>, vector<32x2xf32>
    %cst = arith.constant dense<0.000000e+00> : vector<32x128xf32>
    %7 = tpu.matmul %6, %5, %cst {dimension_numbers = #tpu.dot_dimension_numbers<[1], [0], [0], [1], [0, 0, 1, 1], [], []>} : vector<32x2xf32>, vector<2x128xf32>, vector<32x128xf32> -> vector<32x128xf32>
    %c0_3 = arith.constant 0 : index
    %c0_4 = arith.constant 0 : index
    %8 = vector.load %arg1[%c0_3, %c0_4] : memref<16x128xbf16, #tpu.memory_space<vmem>>, vector<16x128xbf16>
    %9 = arith.extf %8 : vector<16x128xbf16> to vector<16x128xf32>
    %10 = vector.extract_strided_slice %7 {offsets = [0, 0], sizes = [16, 128], strides = [1, 1]} : vector<32x128xf32> to vector<16x128xf32>
    %11 = arith.mulf %9, %10 : vector<16x128xf32>
    %12 = vector.extract_strided_slice %7 {offsets = [16, 0], sizes = [16, 128], strides = [1, 1]} : vector<32x128xf32> to vector<16x128xf32>
    %13 = arith.addf %11, %12 : vector<16x128xf32>
    %cst_5 = arith.constant 0.000000e+00 : f32
    %14 = vector.broadcast %cst_5 : f32 to vector<16x128xf32>
    %15 = arith.maximumf %13, %14 : vector<16x128xf32>
    %16 = arith.truncf %15 : vector<16x128xf32> to vector<16x128xbf16>
    %c0_6 = arith.constant 0 : index
    %c0_7 = arith.constant 0 : index
    %17 = vector.load %arg4[%c0_6, %c0_7] : memref<16x128xbf16, #tpu.memory_space<vmem>>, vector<16x128xbf16>
    tpu.vector_store %arg4[%c0_6, %c0_7], %16 {strides = array<i32>} : memref<16x128xbf16, #tpu.memory_space<vmem>>, vector<16x128xbf16>,
    return
  }
  func.func @transform_0(%arg0: i32) -> (i32, i32) {
    %c0_i32 = arith.constant 0 : i32
    %c0_i32_0 = arith.constant 0 : i32
    return %c0_i32, %arg0 : i32, i32
  }
  func.func @transform_1(%arg0: i32) -> (i32, i32) {
    %c0_i32 = arith.constant 0 : i32
    %c0_i32_0 = arith.constant 0 : i32
    %c0_i32_1 = arith.constant 0 : i32
    return %c0_i32, %c0_i32_0 : i32, i32
  }
  func.func @transform_2(%arg0: i32) -> (i32, i32) {
    %c0_i32 = arith.constant 0 : i32
    %c0_i32_0 = arith.constant 0 : i32
    return %c0_i32, %arg0 : i32, i32
  }
  func.func @transform_3(%arg0: i32) -> (i32, i32) {
    %c0_i32 = arith.constant 0 : i32
    %c0_i32_0 = arith.constant 0 : i32
    return %c0_i32, %arg0 : i32, i32
  }
}

module attributes {stable_mosaic.version = 11 : i64} {
  func.func @_gn_relu_res_kernel(%arg0: i32, %arg1: memref<16x128xbf16, #tpu.memory_space<vmem>>, %arg2: memref<32x2xf32, #tpu.memory_space<vmem>>, %arg3: memref<1x128xi32, #tpu.memory_space<vmem>>, %arg4: memref<16x128xf32, #tpu.memory_space<vmem>>, %arg5: memref<16x128xf32, #tpu.memory_space<vmem>>) attributes {dimension_semantics = [#tpu.dimension_semantics<parallel>], iteration_bounds = array<i64: 1>, scalar_prefetch = 0 : i64, scratch_operands = 0 : i64, tpu.core_type = #tpu.core_type<tc>, window_params = [{transform_indices = @transform_0, window_bounds = array<i64: 16, 128>}, {pipeline_mode = #tpu.pipeline_mode<synchronous>, transform_indices = @transform_1, window_bounds = array<i64: 32, 2>}, {transform_indices = @transform_2, window_bounds = array<i64: 1, 128>}, {transform_indices = @transform_3, window_bounds = array<i64: 16, 128>}, {transform_indices = @transform_4, window_bounds = array<i64: 16, 128>}]} {
    %c0 = arith.constant 0 : index
    %c0_0 = arith.constant 0 : index
    %0 = vector.load %arg4[%c0, %c0_0] : memref<16x128xf32, #tpu.memory_space<vmem>>, vector<16x128xf32>
    %1 = tpu.iota {dimensions = array<i32: 0>} : vector<2x128xi32>
    %c0_1 = arith.constant 0 : index
    %c0_2 = arith.constant 0 : index
    %2 = vector.load %arg3[%c0_1, %c0_2] : memref<1x128xi32, #tpu.memory_space<vmem>>, vector<1x128xi32>
    %3 = vector.broadcast %2 : vector<1x128xi32> to vector<2x128xi32>
    %4 = arith.cmpi eq, %1, %3 : vector<2x128xi32>
    %5 = arith.extui %4 : vector<2x128xi1> to vector<2x128xi32>
    %6 = arith.sitofp %5 : vector<2x128xi32> to vector<2x128xf32>
    %c0_3 = arith.constant 0 : index
    %c0_4 = arith.constant 0 : index
    %7 = vector.load %arg2[%c0_3, %c0_4] : memref<32x2xf32, #tpu.memory_space<vmem>>, vector<32x2xf32>
    %cst = arith.constant dense<0.000000e+00> : vector<32x128xf32>
    %8 = tpu.matmul %7, %6, %cst {dimension_numbers = #tpu.dot_dimension_numbers<[1], [0], [0], [1], [0, 0, 1, 1], [], []>} : vector<32x2xf32>, vector<2x128xf32>, vector<32x128xf32> -> vector<32x128xf32>
    %c0_5 = arith.constant 0 : index
    %c0_6 = arith.constant 0 : index
    %9 = vector.load %arg1[%c0_5, %c0_6] : memref<16x128xbf16, #tpu.memory_space<vmem>>, vector<16x128xbf16>
    %10 = arith.extf %9 : vector<16x128xbf16> to vector<16x128xf32>
    %11 = vector.extract_strided_slice %8 {offsets = [0, 0], sizes = [16, 128], strides = [1, 1]} : vector<32x128xf32> to vector<16x128xf32>
    %12 = arith.mulf %10, %11 : vector<16x128xf32>
    %13 = vector.extract_strided_slice %8 {offsets = [16, 0], sizes = [16, 128], strides = [1, 1]} : vector<32x128xf32> to vector<16x128xf32>
    %14 = arith.addf %12, %13 : vector<16x128xf32>
    %cst_7 = arith.constant 0.000000e+00 : f32
    %15 = vector.broadcast %cst_7 : f32 to vector<16x128xf32>
    %16 = arith.maximumf %14, %15 : vector<16x128xf32>
    %17 = arith.addf %0, %16 : vector<16x128xf32>
    %c0_8 = arith.constant 0 : index
    %c0_9 = arith.constant 0 : index
    %18 = vector.load %arg5[%c0_8, %c0_9] : memref<16x128xf32, #tpu.memory_space<vmem>>, vector<16x128xf32>
    tpu.vector_store %arg5[%c0_8, %c0_9], %17 {strides = array<i32>} : memref<16x128xf32, #tpu.memory_space<vmem>>, vector<16x128xf32>,
    return
  }
  func.func @transform_0(%arg0: i32) -> (i32, i32) {
    %c0_i32 = arith.constant 0 : i32
    %c0_i32_0 = arith.constant 0 : i32
    return %c0_i32, %arg0 : i32, i32
  }
  func.func @transform_1(%arg0: i32) -> (i32, i32) {
    %c0_i32 = arith.constant 0 : i32
    %c0_i32_0 = arith.constant 0 : i32
    %c0_i32_1 = arith.constant 0 : i32
    return %c0_i32, %c0_i32_0 : i32, i32
  }
  func.func @transform_2(%arg0: i32) -> (i32, i32) {
    %c0_i32 = arith.constant 0 : i32
    %c0_i32_0 = arith.constant 0 : i32
    return %c0_i32, %arg0 : i32, i32
  }
  func.func @transform_3(%arg0: i32) -> (i32, i32) {
    %c0_i32 = arith.constant 0 : i32
    %c0_i32_0 = arith.constant 0 : i32
    return %c0_i32, %arg0 : i32, i32
  }
  func.func @transform_4(%arg0: i32) -> (i32, i32) {
    %c0_i32 = arith.constant 0 : i32
    %c0_i32_0 = arith.constant 0 : i32
    return %c0_i32, %arg0 : i32, i32
  }
}

</mosaic_0001>

<llo_original>
// kernel: custom-call.52
$region0: #{custom-call.52}
  %s0 = inlined_call_operand.vmem [shape: u32[48], index: 0, kind: output, shape index: {}]

// kernel: _lambda_.4
$region0: #{_lambda_.4}
  #allocation0 [shape = 'u32[]', space=smem, size = 0x4, offset = 0x4, fixed_abs, tag = 'smem constant byte address 0x4 - core index']
  #allocation1 [shape = 'u32[144,128]{1,0:T(1,128)}', space=vmem, size = 0x12000, scoped, tag = 'internal scratch']
  %s0 = inlined_call_operand.vmem [shape: bf16[432,128], index: 0, kind: input, shape index: {}]
  %s1 = inlined_call_operand.vmem [shape: bf16[16,432], index: 1, kind: input, shape index: {}]
  %s2 = inlined_call_operand.vmem [shape: f32[8,16], index: 2, kind: input, shape index: {}]
  %s3 = inlined_call_operand.vmem [shape: s32[1,128], index: 3, kind: input, shape index: {}]
  %s4 = inlined_call_operand.vmem [shape: bf16[16,128], index: 4, kind: output, shape index: {0}]
  %s5 = inlined_call_operand.vmem [shape: f32[1,2,16], index: 5, kind: output, shape index: {1}]
  %6 = xla_tuple %s4, %s5
  %s7 = sld [smem:[#allocation0]]
  $region34: #{_lambda_.4} parent=0
    _
  %s9 = ssub.s32 1, %s7
  %s10 = scalar_select 0, %s9, %s7
  // Predicated region
  $region2: #{_lambda_.4} parent=0 // pred_check
    _
  $region3: #{_lambda_.4} parent=0 // pred_check_branch
    %12 = sbr.rel (0) target = $region5
  $region4: #{_lambda_.4} parent=0 // pred_region
    _
  $region5: #{_lambda_.4} parent=0 // pred_fallthru
    _
  // Predicated region
  $region6: #{_lambda_.4} parent=0 // pred_check
    _
  $region7: #{_lambda_.4} parent=0 // pred_check_branch
    %14 = sbr.rel (0) target = $region9
  $region8: #{_lambda_.4} parent=0 // pred_region
    _
  $region9: #{_lambda_.4} parent=0 // pred_fallthru
    _
  // Predicated region
  $region10: #{_lambda_.4} parent=0 // pred_check
    _
  $region11: #{_lambda_.4} parent=0 // pred_check_branch
    %16 = sbr.rel (0) target = $region13
  $region12: #{_lambda_.4} parent=0 // pred_region
    _
  $region13: #{_lambda_.4} parent=0 // pred_fallthru
    _
  // Predicated region
  $region14: #{_lambda_.4} parent=0 // pred_check
    _
  $region15: #{_lambda_.4} parent=0 // pred_check_branch
    %18 = sbr.rel (0) target = $region17
  $region16: #{_lambda_.4} parent=0 // pred_region
    _
  $region17: #{_lambda_.4} parent=0 // pred_fallthru
    _
  %v20 = vld [vmem:[%s1] sm:$0xff]
  %v21 = vld [vmem:[%s1 + $0x8] sm:$0xff]
  %v22 = vld [vmem:[%s1 + $0x10] sm:$0xff]
  %v23 = vld [vmem:[%s1 + $0x18] sm:$0xff]
  %v24 = vld [vmem:[%s0] sm:$0xf]
  %v25 = vld [vmem:[%s0 + $0x4] sm:$0xf]
  %v26 = vld [vmem:[%s0 + $0x8] sm:$0xf]
  %v27 = vld [vmem:[%s0 + $0xc] sm:$0xf]
  %v28 = vld [vmem:[%s0 + $0x10] sm:$0xf]
  %v29 = vld [vmem:[%s0 + $0x14] sm:$0xf]
  %v30 = vld [vmem:[%s0 + $0x18] sm:$0xf]
  %v31 = vld [vmem:[%s0 + $0x1c] sm:$0xf]
  %v32 = vld [vmem:[%s0 + $0x20] sm:$0xf]
  %v33 = vld [vmem:[%s0 + $0x24] sm:$0xf]
  %v34 = vld [vmem:[%s0 + $0x28] sm:$0xf]
  %v35 = vld [vmem:[%s0 + $0x2c] sm:$0xf]
  %v36 = vld [vmem:[%s0 + $0x30] sm:$0xf]
  %v37 = vld [vmem:[%s0 + $0x34] sm:$0xf]
  %v38 = vld [vmem:[%s0 + $0x38] sm:$0xf]
  %v39 = vld [vmem:[%s0 + $0x3c] sm:$0xf]
  %v40 = vld [vmem:[%s0 + $0x40] sm:$0xf]
  %v41 = vld [vmem:[%s0 + $0x44] sm:$0xf]
  %v42 = vld [vmem:[%s0 + $0x48] sm:$0xf]
  %v43 = vld [vmem:[%s0 + $0x4c] sm:$0xf]
  %v44 = vld [vmem:[%s0 + $0x50] sm:$0xf]
  %v45 = vld [vmem:[%s0 + $0x54] sm:$0xf]
  %v46 = vld [vmem:[%s0 + $0x58] sm:$0xf]
  %v47 = vld [vmem:[%s0 + $0x5c] sm:$0xf]
  %v48 = vld [vmem:[%s0 + $0x60] sm:$0xf]
  %v49 = vld [vmem:[%s0 + $0x64] sm:$0xf]
  %v50 = vld [vmem:[%s0 + $0x68] sm:$0xf]
  %v51 = vld [vmem:[%s0 + $0x6c] sm:$0xf]
  %v52 = vld [vmem:[%s0 + $0x70] sm:$0xf]
  %v53 = vld [vmem:[%s0 + $0x74] sm:$0xf]
  %v54 = vld [vmem:[%s0 + $0x78] sm:$0xf]
  %v55 = vld [vmem:[%s0 + $0x7c] sm:$0xf]
  %v56 = vld [vmem:[%s0 + $0x80] sm:$0xf]
  %v57 = vld [vmem:[%s0 + $0x84] sm:$0xf]
  %v58 = vld [vmem:[%s0 + $0x88] sm:$0xf]
  %v59 = vld [vmem:[%s0 + $0x8c] sm:$0xf]
  %v60 = vld [vmem:[%s0 + $0x90] sm:$0xf]
  %v61 = vld [vmem:[%s0 + $0x94] sm:$0xf]
  %v62 = vld [vmem:[%s0 + $0x98] sm:$0xf]
  %v63 = vld [vmem:[%s0 + $0x9c] sm:$0xf]
  %v64 = vld [vmem:[%s0 + $0xa0] sm:$0xf]
  %v65 = vld [vmem:[%s0 + $0xa4] sm:$0xf]
  %v66 = vld [vmem:[%s0 + $0xa8] sm:$0xf]
  %v67 = vld [vmem:[%s0 + $0xac] sm:$0xf]
  %v68 = vld [vmem:[%s0 + $0xb0] sm:$0xf]
  %v69 = vld [vmem:[%s0 + $0xb4] sm:$0xf]
  %v70 = vld [vmem:[%s0 + $0xb8] sm:$0xf]
  %v71 = vld [vmem:[%s0 + $0xbc] sm:$0xf]
  %v72 = vld [vmem:[%s0 + $0xc0] sm:$0xf]
  %v73 = vld [vmem:[%s0 + $0xc4] sm:$0xf]
  %v74 = vld [vmem:[%s0 + $0xc8] sm:$0xf]
  %v75 = vld [vmem:[%s0 + $0xcc] sm:$0xf]
  %v76 = vld [vmem:[%s0 + $0xd0] sm:$0xf]
  %v77 = vld [vmem:[%s0 + $0xd4] sm:$0xf]
  %v82 = vunpack.c.l.b16 %v20
  %v83 = vunpack.c.h.b16 %v20
  %v84 = vunpack.c.l.b16 %v21
  %v85 = vunpack.c.h.b16 %v21
  %v86 = vunpack.c.l.b16 %v22
  %v87 = vunpack.c.h.b16 %v22
  %v88 = vunpack.c.l.b16 %v23
  %v89 = vunpack.c.h.b16 %v23
  %v90 = vpack.c.b16 %v86, %v82
  %v91 = vpack.c.b16 %v87, %v83
  %v92 = vpack.c.b16 %v88, %v84
  %v93 = vpack.c.b16 %v89, %v85
  %v151 = vunpack.c.l.b16 %v24
  %v152 = vunpack.c.l.b16 %v25
  %v153 = vunpack.c.l.b16 %v26
  %v154 = vunpack.c.l.b16 %v27
  %v155 = vunpack.c.l.b16 %v28
  %v156 = vunpack.c.l.b16 %v29
  %v157 = vunpack.c.l.b16 %v30
  %v158 = vunpack.c.l.b16 %v31
  %v159 = vunpack.c.l.b16 %v32
  %v160 = vunpack.c.l.b16 %v33
  %v161 = vunpack.c.l.b16 %v34
  %v162 = vunpack.c.l.b16 %v35
  %v163 = vunpack.c.l.b16 %v36
  %v164 = vunpack.c.l.b16 %v37
  %v165 = vunpack.c.l.b16 %v38
  %v166 = vunpack.c.l.b16 %v39
  %v167 = vunpack.c.l.b16 %v40
  %v168 = vunpack.c.l.b16 %v41
  %v169 = vunpack.c.l.b16 %v42
  %v170 = vunpack.c.l.b16 %v43
  %v171 = vunpack.c.l.b16 %v44
  %v172 = vunpack.c.l.b16 %v45
  %v173 = vunpack.c.l.b16 %v46
  %v174 = vunpack.c.l.b16 %v47
  %v175 = vunpack.c.l.b16 %v48
  %v176 = vunpack.c.l.b16 %v49
  %v177 = vunpack.c.l.b16 %v50
  %v178 = vunpack.c.l.b16 %v51
  %v179 = vunpack.c.l.b16 %v52
  %v180 = vunpack.c.l.b16 %v53
  %v181 = vunpack.c.l.b16 %v54
  %v182 = vunpack.c.l.b16 %v55
  %v183 = vunpack.c.l.b16 %v56
  %v184 = vunpack.c.l.b16 %v57
  %v185 = vunpack.c.l.b16 %v58
  %v186 = vunpack.c.l.b16 %v59
  %v187 = vunpack.c.l.b16 %v60
  %v188 = vunpack.c.l.b16 %v61
  %v189 = vunpack.c.l.b16 %v62
  %v190 = vunpack.c.l.b16 %v63
  %v191 = vunpack.c.l.b16 %v64
  %v192 = vunpack.c.l.b16 %v65
  %v193 = vunpack.c.l.b16 %v66
  %v194 = vunpack.c.l.b16 %v67
  %v195 = vunpack.c.l.b16 %v68
  %v196 = vunpack.c.l.b16 %v69
  %v197 = vunpack.c.l.b16 %v70
  %v198 = vunpack.c.l.b16 %v71
  %v199 = vunpack.c.l.b16 %v72
  %v200 = vunpack.c.l.b16 %v73
  %v201 = vunpack.c.l.b16 %v74
  %v202 = vunpack.c.l.b16 %v75
  %v203 = vunpack.c.l.b16 %v76
  %v204 = vunpack.c.l.b16 %v77
  %v205 = vpack.c.b16 %v152, %v151
  %v206 = vpack.c.b16 %v154, %v153
  %v207 = vpack.c.b16 %v156, %v155
  %v208 = vpack.c.b16 %v158, %v157
  %v209 = vpack.c.b16 %v160, %v159
  %v210 = vpack.c.b16 %v162, %v161
  %v211 = vpack.c.b16 %v164, %v163
  %v212 = vpack.c.b16 %v166, %v165
  %v213 = vpack.c.b16 %v168, %v167
  %v214 = vpack.c.b16 %v170, %v169
  %v215 = vpack.c.b16 %v172, %v171
  %v216 = vpack.c.b16 %v174, %v173
  %v217 = vpack.c.b16 %v176, %v175
  %v218 = vpack.c.b16 %v178, %v177
  %v219 = vpack.c.b16 %v180, %v179
  %v220 = vpack.c.b16 %v182, %v181
  %v221 = vpack.c.b16 %v184, %v183
  %v222 = vpack.c.b16 %v186, %v185
  %v223 = vpack.c.b16 %v188, %v187
  %v224 = vpack.c.b16 %v190, %v189
  %v225 = vpack.c.b16 %v192, %v191
  %v226 = vpack.c.b16 %v194, %v193
  %v227 = vpack.c.b16 %v196, %v195
  %v228 = vpack.c.b16 %v198, %v197
  %v229 = vpack.c.b16 %v200, %v199
  %v230 = vpack.c.b16 %v202, %v201
  %v231 = vpack.c.b16 %v204, %v203
  %vm259 = vcmask 392192
  %v261 = vsel %vm259, %v93, 0
  %263 = vmatprep.subr.bf16.mxu0 0
  %264 = vmatpush1.bf16.msra.mxu0 %v205
  %265 = vmatprep.subr.bf16.mxu0 0
  %266 = vmatpush1.bf16.msra.mxu0 %v206
  %267 = vmatprep.subr.bf16.mxu0 0
  %268 = vmatpush1.bf16.msra.mxu0 %v207
  %269 = vmatprep.subr.bf16.mxu0 0
  %270 = vmatpush1.bf16.msra.mxu0 %v208
  %271 = vmatprep.subr.bf16.mxu0 0
  %272 = vmatpush1.bf16.msra.mxu0 %v209
  %273 = vmatprep.subr.bf16.mxu0 0
  %274 = vmatpush1.bf16.msra.mxu0 %v210
  %275 = vmatprep.subr.bf16.mxu0 0
  %276 = vmatpush1.bf16.msra.mxu0 %v211
  %277 = vmatprep.subr.bf16.mxu0 0
  %278 = vmatpush1.bf16.msra.mxu0 %v212
  %279 = vmatprep.subr.bf16.mxu0 0
  %280 = vmatpush1.bf16.msra.mxu0 %v213
  %281 = vmatprep.subr.bf16.mxu0 0
  %282 = vmatpush1.bf16.msra.mxu0 %v214
  %283 = vmatprep.subr.bf16.mxu0 0
  %284 = vmatpush1.bf16.msra.mxu0 %v215
  %285 = vmatprep.subr.bf16.mxu0 0
  %286 = vmatpush1.bf16.msra.mxu0 %v216
  %287 = vmatprep.subr.bf16.mxu0 0
  %288 = vmatpush1.bf16.msra.mxu0 %v217
  %289 = vmatprep.subr.bf16.mxu0 0
  %290 = vmatpush1.bf16.msra.mxu0 %v218
  %291 = vmatprep.subr.bf16.mxu0 0
  %292 = vmatpush1.bf16.msra.mxu0 %v219
  %293 = vmatprep.subr.bf16.mxu0 0
  %294 = vmatpush1.bf16.msra.mxu0 %v220
  %295 = vmatprep.mubr.bf16.mxu0 %v91
  %296 = vmatmul.mubr.bf16.gmra.mrb[0].mxu0 %v90
  %v297 = vpop.f32.mrb[0].mxu0
  %v298 = vadd.f32 0.0, %v297
  %v299 = vpop.f32.mrb[0].mxu0
  %v300 = vpop.f32.mrb[0].mxu0
  %v301 = vadd.f32 0.0, %v300
  %v302 = vpop.f32.mrb[0].mxu0
  %303 = vdwg.mxu0
  %304 = vmatprep.subr.bf16.mxu0 0
  %305 = vmatpush1.bf16.msra.mxu0 %v221
  %306 = vmatprep.subr.bf16.mxu0 0
  %307 = vmatpush1.bf16.msra.mxu0 %v222
  %308 = vmatprep.subr.bf16.mxu0 0
  %309 = vmatpush1.bf16.msra.mxu0 %v223
  %310 = vmatprep.subr.bf16.mxu0 0
  %311 = vmatpush1.bf16.msra.mxu0 %v224
  %312 = vmatprep.subr.bf16.mxu0 0
  %313 = vmatpush1.bf16.msra.mxu0 %v225
  %314 = vmatprep.subr.bf16.mxu0 0
  %315 = vmatpush1.bf16.msra.mxu0 %v226
  %316 = vmatprep.subr.bf16.mxu0 0
  %317 = vmatpush1.bf16.msra.mxu0 %v227
  %318 = vmatprep.subr.bf16.mxu0 0
  %319 = vmatpush1.bf16.msra.mxu0 %v228
  %320 = vmatprep.subr.bf16.mxu0 0
  %321 = vmatpush1.bf16.msra.mxu0 %v229
  %322 = vmatprep.subr.bf16.mxu0 0
  %323 = vmatpush1.bf16.msra.mxu0 %v230
  %324 = vmatprep.subr.bf16.mxu0 0
  %325 = vmatpush1.bf16.msra.mxu0 %v231
  %326 = vmatprep.subr.bf16.mxu0 0
  %327 = vmatpush1.bf16.msra.mxu0 0
  %328 = vmatprep.subr.bf16.mxu0 0
  %329 = vmatpush1.bf16.msra.mxu0 0
  %330 = vmatprep.subr.bf16.mxu0 0
  %331 = vmatpush1.bf16.msra.mxu0 0
  %332 = vmatprep.subr.bf16.mxu0 0
  %333 = vmatpush1.bf16.msra.mxu0 0
  %334 = vmatprep.subr.bf16.mxu0 0
  %335 = vmatpush1.bf16.msra.mxu0 0
  %336 = vmatprep.mubr.bf16.mxu0 %v261
  %337 = vmatmul.mubr.bf16.gmra.mrb[0].mxu0 %v92
  %v338 = vpop.f32.mrb[0].mxu0
  %v339 = vadd.f32 %v298, %v338
  %v340 = vpop.f32.mrb[0].mxu0
  %v341 = vpop.f32.mrb[0].mxu0
  %v342 = vadd.f32 %v301, %v341
  %v343 = vpop.f32.mrb[0].mxu0
  %344 = vdwg.mxu0
  %v345 = vpack.c.bf16 %v342, %v339
  %v347 = vunpack.c.l.b16 %v345
  %v348 = vunpack.c.h.b16 %v345
  %v349 = vpack.c.b16 %v347, %v347
  %v350 = vpack.c.b16 %v348, %v348
  %353 = vst [vmem:[%s4] sm:$0xf] %v349
  %354 = vst [vmem:[%s4 + $0x4] sm:$0xf] %v350
  %v355 = vlaneseq
  %v356 = vshrl.u32 %v355, 7
  %v357 = vld [vmem:[%s3] sm:$0x1]
  %v358 = vlaneseq
  %v359 = vshrl.u32 %v358, 7
  %v360 = vsub.s32 0, %v359
  %v361 = vrot.slane %v357, %v360
  %vm362 = vcmp.eq.s32.totalorder %v356, %v361
  %v363 = vsel %vm362, 1, 0
  %v364 = vcvt.s32.f32 %v363
  %v365 = vld [vmem:[%s2] sm:$0xff]
  %vm366 = vcmask 130048
  %v368 = vsel %vm366, %v365, 0
  %370 = vmatprep.subr.mxu0 0.0
  %371 = vmatpush1.msra.mxu0 %v339
  %372 = vmatprep.subr.mxu0 0.0
  %373 = vmatpush1.msra.mxu0 %v342
  %374 = vmatprep.subr.mxu0 0.0
  %375 = vmatpush1.msra.mxu0 0.0
  %376 = vmatprep.subr.mxu0 0.0
  %377 = vmatpush1.msra.mxu0 0.0
  %378 = vmatprep.subr.mxu0 0.0
  %379 = vmatpush1.msra.mxu0 0.0
  %380 = vmatprep.subr.mxu0 0.0
  %381 = vmatpush1.msra.mxu0 0.0
  %382 = vmatprep.subr.mxu0 0.0
  %383 = vmatpush1.msra.mxu0 0.0
  %384 = vmatprep.subr.mxu0 0.0
  %385 = vmatpush1.msra.mxu0 0.0
  %386 = vmatprep.subr.mxu0 0.0
  %387 = vmatpush1.msra.mxu0 0.0
  %388 = vmatprep.subr.mxu0 0.0
  %389 = vmatpush1.msra.mxu0 0.0
  %390 = vmatprep.subr.mxu0 0.0
  %391 = vmatpush1.msra.mxu0 0.0
  %392 = vmatprep.subr.mxu0 0.0
  %393 = vmatpush1.msra.mxu0 0.0
  %394 = vmatprep.subr.mxu0 0.0
  %395 = vmatpush1.msra.mxu0 0.0
  %396 = vmatprep.subr.mxu0 0.0
  %397 = vmatpush1.msra.mxu0 0.0
  %398 = vmatprep.subr.mxu0 0.0
  %399 = vmatpush1.msra.mxu0 0.0
  %400 = vmatprep.subr.mxu0 0.0
  %401 = vmatpush1.msra.mxu0 0.0
  %402 = vmatprep.subr.mxu0 0.0
  %403 = vmatpush1.msra.mxu0 0.0
  %404 = vmatprep.subr.mxu0 0.0
  %405 = vmatpush1.msra.mxu0 0.0
  %406 = vmatprep.subr.mxu0 0.0
  %407 = vmatpush1.msra.mxu0 0.0
  %408 = vmatprep.subr.mxu0 0.0
  %409 = vmatpush1.msra.mxu0 0.0
  %410 = vmatprep.subr.mxu0 0.0
  %411 = vmatpush1.msra.mxu0 0.0
  %412 = vmatprep.subr.mxu0 0.0
  %413 = vmatpush1.msra.mxu0 0.0
  %414 = vmatprep.subr.mxu0 0.0
  %415 = vmatpush1.msra.mxu0 0.0
  %416 = vmatprep.subr.mxu0 0.0
  %417 = vmatpush1.msra.mxu0 0.0
  %418 = vmatprep.subr.mxu0 0.0
  %419 = vmatpush1.msra.mxu0 0.0
  %420 = vmatprep.subr.mxu0 0.0
  %421 = vmatpush1.msra.mxu0 0.0
  %422 = vmatprep.subr.mxu0 0.0
  %423 = vmatpush1.msra.mxu0 0.0
  %424 = vmatprep.subr.mxu0 0.0
  %425 = vmatpush1.msra.mxu0 0.0
  %426 = vmatprep.subr.mxu0 0.0
  %427 = vmatpush1.msra.mxu0 0.0
  %428 = vmatprep.subr.mxu0 0.0
  %429 = vmatpush1.msra.mxu0 0.0
  %430 = vmatprep.subr.mxu0 0.0
  %431 = vmatpush1.msra.mxu0 0.0
  %432 = vmatprep.subr.mxu0 0.0
  %433 = vmatpush1.msra.mxu0 0.0
  %434 = vmatprep.mubr.f32.mxu0 0.0
  %435 = vmatmul.mubr.f32.gmra.mrb[0].mxu0 %v368
  %v436 = vpop.f32.mrb[0].mxu0
  %v437 = vadd.f32 0.0, %v436
  %v438 = vpop.f32.mrb[0].mxu0
  %439 = vdwg.mxu0
  %v440 = vmul.f32 %v339, %v339
  %v441 = vmul.f32 %v342, %v342
  %442 = vmatprep.subr.mxu0 0.0
  %443 = vmatpush1.msra.mxu0 %v440
  %444 = vmatprep.subr.mxu0 0.0
  %445 = vmatpush1.msra.mxu0 %v441
  %446 = vmatprep.subr.mxu0 0.0
  %447 = vmatpush1.msra.mxu0 0.0
  %448 = vmatprep.subr.mxu0 0.0
  %449 = vmatpush1.msra.mxu0 0.0
  %450 = vmatprep.subr.mxu0 0.0
  %451 = vmatpush1.msra.mxu0 0.0
  %452 = vmatprep.subr.mxu0 0.0
  %453 = vmatpush1.msra.mxu0 0.0
  %454 = vmatprep.subr.mxu0 0.0
  %455 = vmatpush1.msra.mxu0 0.0
  %456 = vmatprep.subr.mxu0 0.0
  %457 = vmatpush1.msra.mxu0 0.0
  %458 = vmatprep.subr.mxu0 0.0
  %459 = vmatpush1.msra.mxu0 0.0
  %460 = vmatprep.subr.mxu0 0.0
  %461 = vmatpush1.msra.mxu0 0.0
  %462 = vmatprep.subr.mxu0 0.0
  %463 = vmatpush1.msra.mxu0 0.0
  %464 = vmatprep.subr.mxu0 0.0
  %465 = vmatpush1.msra.mxu0 0.0
  %466 = vmatprep.subr.mxu0 0.0
  %467 = vmatpush1.msra.mxu0 0.0
  %468 = vmatprep.subr.mxu0 0.0
  %469 = vmatpush1.msra.mxu0 0.0
  %470 = vmatprep.subr.mxu0 0.0
  %471 = vmatpush1.msra.mxu0 0.0
  %472 = vmatprep.subr.mxu0 0.0
  %473 = vmatpush1.msra.mxu0 0.0
  %474 = vmatprep.subr.mxu0 0.0
  %475 = vmatpush1.msra.mxu0 0.0
  %476 = vmatprep.subr.mxu0 0.0
  %477 = vmatpush1.msra.mxu0 0.0
  %478 = vmatprep.subr.mxu0 0.0
  %479 = vmatpush1.msra.mxu0 0.0
  %480 = vmatprep.subr.mxu0 0.0
  %481 = vmatpush1.msra.mxu0 0.0
  %482 = vmatprep.subr.mxu0 0.0
  %483 = vmatpush1.msra.mxu0 0.0
  %484 = vmatprep.subr.mxu0 0.0
  %485 = vmatpush1.msra.mxu0 0.0
  %486 = vmatprep.subr.mxu0 0.0
  %487 = vmatpush1.msra.mxu0 0.0
  %488 = vmatprep.subr.mxu0 0.0
  %489 = vmatpush1.msra.mxu0 0.0
  %490 = vmatprep.subr.mxu0 0.0
  %491 = vmatpush1.msra.mxu0 0.0
  %492 = vmatprep.subr.mxu0 0.0
  %493 = vmatpush1.msra.mxu0 0.0
  %494 = vmatprep.subr.mxu0 0.0
  %495 = vmatpush1.msra.mxu0 0.0
  %496 = vmatprep.subr.mxu0 0.0
  %497 = vmatpush1.msra.mxu0 0.0
  %498 = vmatprep.subr.mxu0 0.0
  %499 = vmatpush1.msra.mxu0 0.0
  %500 = vmatprep.subr.mxu0 0.0
  %501 = vmatpush1.msra.mxu0 0.0
  %502 = vmatprep.subr.mxu0 0.0
  %503 = vmatpush1.msra.mxu0 0.0
  %504 = vmatprep.subr.mxu0 0.0
  %505 = vmatpush1.msra.mxu0 0.0
  %506 = vmatprep.mubr.f32.mxu0 0.0
  %507 = vmatmul.mubr.f32.gmra.mrb[0].mxu0 %v368
  %v508 = vpop.f32.mrb[0].mxu0
  %v509 = vadd.f32 0.0, %v508
  %v510 = vpop.f32.mrb[0].mxu0
  %511 = vdwg.mxu0
  %512 = vmatprep.subr.mxu0 0.0
  %513 = vmatpush1.xpose.msra.mxu0 %v437
  %514 = vmatprep.subr.mxu0 0.0
  %515 = vmatpush1.xpose.msra.mxu0 %v509
  %516 = vmatprep.subr.mxu0 0.0
  %517 = vmatpush1.xpose.msra.mxu0 0.0
  %518 = vmatprep.subr.mxu0 0.0
  %519 = vmatpush1.xpose.msra.mxu0 0.0
  %520 = vmatprep.subr.mxu0 0.0
  %521 = vmatpush1.xpose.msra.mxu0 0.0
  %522 = vmatprep.subr.mxu0 0.0
  %523 = vmatpush1.xpose.msra.mxu0 0.0
  %524 = vmatprep.subr.mxu0 0.0
  %525 = vmatpush1.xpose.msra.mxu0 0.0
  %526 = vmatprep.subr.mxu0 0.0
  %527 = vmatpush1.xpose.msra.mxu0 0.0
  %528 = vmatprep.subr.mxu0 0.0
  %529 = vmatpush1.xpose.msra.mxu0 0.0
  %530 = vmatprep.subr.mxu0 0.0
  %531 = vmatpush1.xpose.msra.mxu0 0.0
  %532 = vmatprep.subr.mxu0 0.0
  %533 = vmatpush1.xpose.msra.mxu0 0.0
  %534 = vmatprep.subr.mxu0 0.0
  %535 = vmatpush1.xpose.msra.mxu0 0.0
  %536 = vmatprep.subr.mxu0 0.0
  %537 = vmatpush1.xpose.msra.mxu0 0.0
  %538 = vmatprep.subr.mxu0 0.0
  %539 = vmatpush1.xpose.msra.mxu0 0.0
  %540 = vmatprep.subr.mxu0 0.0
  %541 = vmatpush1.xpose.msra.mxu0 0.0
  %542 = vmatprep.subr.mxu0 0.0
  %543 = vmatpush1.xpose.msra.mxu0 0.0
  %544 = vmatprep.subr.mxu0 0.0
  %545 = vmatpush1.xpose.msra.mxu0 0.0
  %546 = vmatprep.subr.mxu0 0.0
  %547 = vmatpush1.xpose.msra.mxu0 0.0
  %548 = vmatprep.subr.mxu0 0.0
  %549 = vmatpush1.xpose.msra.mxu0 0.0
  %550 = vmatprep.subr.mxu0 0.0
  %551 = vmatpush1.xpose.msra.mxu0 0.0
  %552 = vmatprep.subr.mxu0 0.0
  %553 = vmatpush1.xpose.msra.mxu0 0.0
  %554 = vmatprep.subr.mxu0 0.0
  %555 = vmatpush1.xpose.msra.mxu0 0.0
  %556 = vmatprep.subr.mxu0 0.0
  %557 = vmatpush1.xpose.msra.mxu0 0.0
  %558 = vmatprep.subr.mxu0 0.0
  %559 = vmatpush1.xpose.msra.mxu0 0.0
  %560 = vmatprep.subr.mxu0 0.0
  %561 = vmatpush1.xpose.msra.mxu0 0.0
  %562 = vmatprep.subr.mxu0 0.0
  %563 = vmatpush1.xpose.msra.mxu0 0.0
  %564 = vmatprep.subr.mxu0 0.0
  %565 = vmatpush1.xpose.msra.mxu0 0.0
  %566 = vmatprep.subr.mxu0 0.0
  %567 = vmatpush1.xpose.msra.mxu0 0.0
  %568 = vmatprep.subr.mxu0 0.0
  %569 = vmatpush1.xpose.msra.mxu0 0.0
  %570 = vmatprep.subr.mxu0 0.0
  %571 = vmatpush1.xpose.msra.mxu0 0.0
  %572 = vmatprep.subr.mxu0 0.0
  %573 = vmatpush1.xpose.msra.mxu0 0.0
  %574 = vmatprep.subr.mxu0 0.0
  %575 = vmatpush1.xpose.msra.mxu0 0.0
  %576 = vmatprep.mubr.f32.mxu0 0.0
  %577 = vmatmul.mubr.f32.gmra.mrb[0].mxu0 %v364
  %v578 = vpop.f32.mrb[0].mxu0
  %v579 = vadd.f32 0.0, %v578
  %v580 = vpop.f32.mrb[0].mxu0
  %581 = vdwg.mxu0
  %vm582 = vcmask 123904
  %583 = vst.msk [vmem:[%s5] sm:$0x3] %vm582, %v579
  // Predicated region
  $region18: #{_lambda_.4} parent=0 // pred_check
    _
  $region19: #{_lambda_.4} parent=0 // pred_check_branch
    %585 = sbr.rel (0) target = $region21
  $region20: #{_lambda_.4} parent=0 // pred_region
    _
  $region21: #{_lambda_.4} parent=0 // pred_fallthru
    _
  // Predicated region
  $region22: #{_lambda_.4} parent=0 // pred_check
    _
  $region23: #{_lambda_.4} parent=0 // pred_check_branch
    %587 = sbr.rel (0) target = $region25
  $region24: #{_lambda_.4} parent=0 // pred_region
    _
  $region25: #{_lambda_.4} parent=0 // pred_fallthru
    _
  // Predicated region
  $region26: #{_lambda_.4} parent=0 // pred_check
    _
  $region27: #{_lambda_.4} parent=0 // pred_check_branch
    %589 = sbr.rel (0) target = $region29
  $region28: #{_lambda_.4} parent=0 // pred_region
    _
  $region29: #{_lambda_.4} parent=0 // pred_fallthru
    _
  // Predicated region
  $region30: #{_lambda_.4} parent=0 // pred_check
    _
  $region31: #{_lambda_.4} parent=0 // pred_check_branch
    %591 = sbr.rel (0) target = $region33
  $region32: #{_lambda_.4} parent=0 // pred_region
    _
  $region33: #{_lambda_.4} parent=0 // pred_fallthru
    _

// kernel: _lambda_.5
$region0: #{_lambda_.5}
  #allocation0 [shape = 'u32[]', space=smem, size = 0x4, offset = 0x4, fixed_abs, tag = 'smem constant byte address 0x4 - core index']
  #allocation1 [shape = 'u32[144,128]{1,0:T(1,128)}', space=vmem, size = 0x12000, scoped, tag = 'internal scratch']
  %s0 = inlined_call_operand.vmem [shape: bf16[16,128], index: 0, kind: input, shape index: {}]
  %s1 = inlined_call_operand.vmem [shape: f32[32,2], index: 1, kind: input, shape index: {}]
  %s2 = inlined_call_operand.vmem [shape: s32[1,128], index: 2, kind: input, shape index: {}]
  %s3 = inlined_call_operand.vmem [shape: bf16[16,128], index: 3, kind: output, shape index: {}]
  %s4 = sld [smem:[#allocation0]]
  $region22: #{_lambda_.5} parent=0
    _
  %s6 = ssub.s32 1, %s4
  %s7 = scalar_select 0, %s6, %s4
  // Predicated region
  $region2: #{_lambda_.5} parent=0 // pred_check
    _
  $region3: #{_lambda_.5} parent=0 // pred_check_branch
    %9 = sbr.rel (0) target = $region5
  $region4: #{_lambda_.5} parent=0 // pred_region
    _
  $region5: #{_lambda_.5} parent=0 // pred_fallthru
    _
  // Predicated region
  $region6: #{_lambda_.5} parent=0 // pred_check
    _
  $region7: #{_lambda_.5} parent=0 // pred_check_branch
    %11 = sbr.rel (0) target = $region9
  $region8: #{_lambda_.5} parent=0 // pred_region
    _
  $region9: #{_lambda_.5} parent=0 // pred_fallthru
    _
  // Predicated region
  $region10: #{_lambda_.5} parent=0 // pred_check
    _
  $region11: #{_lambda_.5} parent=0 // pred_check_branch
    %13 = sbr.rel (0) target = $region13
  $region12: #{_lambda_.5} parent=0 // pred_region
    _
  $region13: #{_lambda_.5} parent=0 // pred_fallthru
    _
  %v14 = vlaneseq
  %v15 = vshrl.u32 %v14, 7
  %v16 = vld [vmem:[%s2] sm:$0x1]
  %v17 = vlaneseq
  %v18 = vshrl.u32 %v17, 7
  %v19 = vsub.s32 0, %v18
  %v20 = vrot.slane %v16, %v19
  %vm21 = vcmp.eq.s32.totalorder %v15, %v20
  %v22 = vsel %vm21, 1, 0
  %v23 = vcvt.s32.f32 %v22
  %v24 = vld [vmem:[%s1] sm:$0xff]
  %v25 = vld [vmem:[%s1 + $0x8] sm:$0xff]
  %v26 = vld [vmem:[%s1 + $0x10] sm:$0xff]
  %v27 = vld [vmem:[%s1 + $0x18] sm:$0xff]
  %vm28 = vcmask 15360
  %v30 = vsel %vm28, %v24, 0
  %v33 = vsel %vm28, %v25, 0
  %v36 = vsel %vm28, %v26, 0
  %v39 = vsel %vm28, %v27, 0
  %vm41 = vcmask 1041408
  %v43 = vsel %vm41, %v23, 0
  %45 = vmatprep.subr.mxu0 0.0
  %46 = vmatpush1.msra.mxu0 %v43
  %47 = vmatprep.subr.mxu0 0.0
  %48 = vmatpush1.msra.mxu0 0.0
  %49 = vmatprep.subr.mxu0 0.0
  %50 = vmatpush1.msra.mxu0 0.0
  %51 = vmatprep.subr.mxu0 0.0
  %52 = vmatpush1.msra.mxu0 0.0
  %53 = vmatprep.subr.mxu0 0.0
  %54 = vmatpush1.msra.mxu0 0.0
  %55 = vmatprep.subr.mxu0 0.0
  %56 = vmatpush1.msra.mxu0 0.0
  %57 = vmatprep.subr.mxu0 0.0
  %58 = vmatpush1.msra.mxu0 0.0
  %59 = vmatprep.subr.mxu0 0.0
  %60 = vmatpush1.msra.mxu0 0.0
  %61 = vmatprep.subr.mxu0 0.0
  %62 = vmatpush1.msra.mxu0 0.0
  %63 = vmatprep.subr.mxu0 0.0
  %64 = vmatpush1.msra.mxu0 0.0
  %65 = vmatprep.subr.mxu0 0.0
  %66 = vmatpush1.msra.mxu0 0.0
  %67 = vmatprep.subr.mxu0 0.0
  %68 = vmatpush1.msra.mxu0 0.0
  %69 = vmatprep.subr.mxu0 0.0
  %70 = vmatpush1.msra.mxu0 0.0
  %71 = vmatprep.subr.mxu0 0.0
  %72 = vmatpush1.msra.mxu0 0.0
  %73 = vmatprep.subr.mxu0 0.0
  %74 = vmatpush1.msra.mxu0 0.0
  %75 = vmatprep.subr.mxu0 0.0
  %76 = vmatpush1.msra.mxu0 0.0
  %77 = vmatprep.subr.mxu0 0.0
  %78 = vmatpush1.msra.mxu0 0.0
  %79 = vmatprep.subr.mxu0 0.0
  %80 = vmatpush1.msra.mxu0 0.0
  %81 = vmatprep.subr.mxu0 0.0
  %82 = vmatpush1.msra.mxu0 0.0
  %83 = vmatprep.subr.mxu0 0.0
  %84 = vmatpush1.msra.mxu0 0.0
  %85 = vmatprep.subr.mxu0 0.0
  %86 = vmatpush1.msra.mxu0 0.0
  %87 = vmatprep.subr.mxu0 0.0
  %88 = vmatpush1.msra.mxu0 0.0
  %89 = vmatprep.subr.mxu0 0.0
  %90 = vmatpush1.msra.mxu0 0.0
  %91 = vmatprep.subr.mxu0 0.0
  %92 = vmatpush1.msra.mxu0 0.0
  %93 = vmatprep.subr.mxu0 0.0
  %94 = vmatpush1.msra.mxu0 0.0
  %95 = vmatprep.subr.mxu0 0.0
  %96 = vmatpush1.msra.mxu0 0.0
  %97 = vmatprep.subr.mxu0 0.0
  %98 = vmatpush1.msra.mxu0 0.0
  %99 = vmatprep.subr.mxu0 0.0
  %100 = vmatpush1.msra.mxu0 0.0
  %101 = vmatprep.subr.mxu0 0.0
  %102 = vmatpush1.msra.mxu0 0.0
  %103 = vmatprep.subr.mxu0 0.0
  %104 = vmatpush1.msra.mxu0 0.0
  %105 = vmatprep.subr.mxu0 0.0
  %106 = vmatpush1.msra.mxu0 0.0
  %107 = vmatprep.subr.mxu0 0.0
  %108 = vmatpush1.msra.mxu0 0.0
  %109 = vmatprep.mubr.f32.mxu0 0.0
  %110 = vmatmul.mubr.f32.gmra.mrb[0].mxu0 %v30
  %v111 = vpop.f32.mrb[0].mxu0
  %v112 = vadd.f32 0.0, %v111
  %v113 = vpop.f32.mrb[0].mxu0
  %114 = vmatprep.mubr.f32.mxu0 0.0
  %115 = vmatmul.mubr.f32.gmra.mrb[0].mxu0 %v33
  %v116 = vpop.f32.mrb[0].mxu0
  %v117 = vadd.f32 0.0, %v116
  %v118 = vpop.f32.mrb[0].mxu0
  %119 = vmatprep.mubr.f32.mxu0 0.0
  %120 = vmatmul.mubr.f32.gmra.mrb[0].mxu0 %v36
  %v121 = vpop.f32.mrb[0].mxu0
  %v122 = vadd.f32 0.0, %v121
  %v123 = vpop.f32.mrb[0].mxu0
  %124 = vmatprep.mubr.f32.mxu0 0.0
  %125 = vmatmul.mubr.f32.gmra.mrb[0].mxu0 %v39
  %v126 = vpop.f32.mrb[0].mxu0
  %v127 = vadd.f32 0.0, %v126
  %v128 = vpop.f32.mrb[0].mxu0
  %129 = vdwg.mxu0
  %v130 = vld [vmem:[%s0] sm:$0xf]
  %v131 = vld [vmem:[%s0 + $0x4] sm:$0xf]
  %v132 = vunpack.c.l.bf16 %v130
  %v133 = vunpack.c.l.bf16 %v131
  %v134 = vmul.f32 %v132, %v112
  %v135 = vmul.f32 %v133, %v117
  %v136 = vadd.f32 %v134, %v122
  %v137 = vadd.f32 %v135, %v127
  %v138 = vmax.f32 %v136, 0.0
  %v139 = vmax.f32 %v137, 0.0
  %v140 = vpack.c.bf16 %v139, %v138
  %v142 = vunpack.c.l.b16 %v140
  %v143 = vunpack.c.h.b16 %v140
  %v144 = vpack.c.b16 %v142, %v142
  %v145 = vpack.c.b16 %v143, %v143
  %148 = vst [vmem:[%s3] sm:$0xf] %v144
  %149 = vst [vmem:[%s3 + $0x4] sm:$0xf] %v145
  // Predicated region
  $region14: #{_lambda_.5} parent=0 // pred_check
    _
  $region15: #{_lambda_.5} parent=0 // pred_check_branch
    %151 = sbr.rel (0) target = $region17
  $region16: #{_lambda_.5} parent=0 // pred_region
    _
  $region17: #{_lambda_.5} parent=0 // pred_fallthru
    _
  // Predicated region
  $region18: #{_lambda_.5} parent=0 // pred_check
    _
  $region19: #{_lambda_.5} parent=0 // pred_check_branch
    %153 = sbr.rel (0) target = $region21
  $region20: #{_lambda_.5} parent=0 // pred_region
    _
  $region21: #{_lambda_.5} parent=0 // pred_fallthru
    _

// kernel: _lambda_.7
$region0: #{_lambda_.7}
  #allocation0 [shape = 'u32[]', space=smem, size = 0x4, offset = 0x4, fixed_abs, tag = 'smem constant byte address 0x4 - core index']
  #allocation1 [shape = 'u32[144,128]{1,0:T(1,128)}', space=vmem, size = 0x12000, scoped, tag = 'internal scratch']
  %s0 = inlined_call_operand.vmem [shape: bf16[16,128], index: 0, kind: input, shape index: {}]
  %s1 = inlined_call_operand.vmem [shape: f32[32,2], index: 1, kind: input, shape index: {}]
  %s2 = inlined_call_operand.vmem [shape: s32[1,128], index: 2, kind: input, shape index: {}]
  %s3 = inlined_call_operand.vmem [shape: f32[16,128], index: 3, kind: input, shape index: {}, may-alias: {3,4}]
  %s4 = inlined_call_operand.vmem [shape: f32[16,128], index: 4, kind: output, shape index: {}, may-alias: {3,4}]
  %s5 = sld [smem:[#allocation0]]
  $region26: #{_lambda_.7} parent=0
    _
  %s7 = ssub.s32 1, %s5
  %s8 = scalar_select 0, %s7, %s5
  // Predicated region
  $region2: #{_lambda_.7} parent=0 // pred_check
    _
  $region3: #{_lambda_.7} parent=0 // pred_check_branch
    %10 = sbr.rel (0) target = $region5
  $region4: #{_lambda_.7} parent=0 // pred_region
    _
  $region5: #{_lambda_.7} parent=0 // pred_fallthru
    _
  // Predicated region
  $region6: #{_lambda_.7} parent=0 // pred_check
    _
  $region7: #{_lambda_.7} parent=0 // pred_check_branch
    %12 = sbr.rel (0) target = $region9
  $region8: #{_lambda_.7} parent=0 // pred_region
    _
  $region9: #{_lambda_.7} parent=0 // pred_fallthru
    _
  // Predicated region
  $region10: #{_lambda_.7} parent=0 // pred_check
    _
  $region11: #{_lambda_.7} parent=0 // pred_check_branch
    %14 = sbr.rel (0) target = $region13
  $region12: #{_lambda_.7} parent=0 // pred_region
    _
  $region13: #{_lambda_.7} parent=0 // pred_fallthru
    _
  // Predicated region
  $region14: #{_lambda_.7} parent=0 // pred_check
    _
  $region15: #{_lambda_.7} parent=0 // pred_check_branch
    %16 = sbr.rel (0) target = $region17
  $region16: #{_lambda_.7} parent=0 // pred_region
    _
  $region17: #{_lambda_.7} parent=0 // pred_fallthru
    _
  %v17 = vld [vmem:[%s3] sm:$0xff]
  %v18 = vld [vmem:[%s3 + $0x8] sm:$0xff]
  %v19 = vlaneseq
  %v20 = vshrl.u32 %v19, 7
  %v21 = vld [vmem:[%s2] sm:$0x1]
  %v22 = vlaneseq
  %v23 = vshrl.u32 %v22, 7
  %v24 = vsub.s32 0, %v23
  %v25 = vrot.slane %v21, %v24
  %vm26 = vcmp.eq.s32.totalorder %v20, %v25
  %v27 = vsel %vm26, 1, 0
  %v28 = vcvt.s32.f32 %v27
  %v29 = vld [vmem:[%s1] sm:$0xff]
  %v30 = vld [vmem:[%s1 + $0x8] sm:$0xff]
  %v31 = vld [vmem:[%s1 + $0x10] sm:$0xff]
  %v32 = vld [vmem:[%s1 + $0x18] sm:$0xff]
  %vm33 = vcmask 15360
  %v35 = vsel %vm33, %v29, 0
  %v38 = vsel %vm33, %v30, 0
  %v41 = vsel %vm33, %v31, 0
  %v44 = vsel %vm33, %v32, 0
  %vm46 = vcmask 1041408
  %v48 = vsel %vm46, %v28, 0
  %50 = vmatprep.subr.mxu0 0.0
  %51 = vmatpush1.msra.mxu0 %v48
  %52 = vmatprep.subr.mxu0 0.0
  %53 = vmatpush1.msra.mxu0 0.0
  %54 = vmatprep.subr.mxu0 0.0
  %55 = vmatpush1.msra.mxu0 0.0
  %56 = vmatprep.subr.mxu0 0.0
  %57 = vmatpush1.msra.mxu0 0.0
  %58 = vmatprep.subr.mxu0 0.0
  %59 = vmatpush1.msra.mxu0 0.0
  %60 = vmatprep.subr.mxu0 0.0
  %61 = vmatpush1.msra.mxu0 0.0
  %62 = vmatprep.subr.mxu0 0.0
  %63 = vmatpush1.msra.mxu0 0.0
  %64 = vmatprep.subr.mxu0 0.0
  %65 = vmatpush1.msra.mxu0 0.0
  %66 = vmatprep.subr.mxu0 0.0
  %67 = vmatpush1.msra.mxu0 0.0
  %68 = vmatprep.subr.mxu0 0.0
  %69 = vmatpush1.msra.mxu0 0.0
  %70 = vmatprep.subr.mxu0 0.0
  %71 = vmatpush1.msra.mxu0 0.0
  %72 = vmatprep.subr.mxu0 0.0
  %73 = vmatpush1.msra.mxu0 0.0
  %74 = vmatprep.subr.mxu0 0.0
  %75 = vmatpush1.msra.mxu0 0.0
  %76 = vmatprep.subr.mxu0 0.0
  %77 = vmatpush1.msra.mxu0 0.0
  %78 = vmatprep.subr.mxu0 0.0
  %79 = vmatpush1.msra.mxu0 0.0
  %80 = vmatprep.subr.mxu0 0.0
  %81 = vmatpush1.msra.mxu0 0.0
  %82 = vmatprep.subr.mxu0 0.0
  %83 = vmatpush1.msra.mxu0 0.0
  %84 = vmatprep.subr.mxu0 0.0
  %85 = vmatpush1.msra.mxu0 0.0
  %86 = vmatprep.subr.mxu0 0.0
  %87 = vmatpush1.msra.mxu0 0.0
  %88 = vmatprep.subr.mxu0 0.0
  %89 = vmatpush1.msra.mxu0 0.0
  %90 = vmatprep.subr.mxu0 0.0
  %91 = vmatpush1.msra.mxu0 0.0
  %92 = vmatprep.subr.mxu0 0.0
  %93 = vmatpush1.msra.mxu0 0.0
  %94 = vmatprep.subr.mxu0 0.0
  %95 = vmatpush1.msra.mxu0 0.0
  %96 = vmatprep.subr.mxu0 0.0
  %97 = vmatpush1.msra.mxu0 0.0
  %98 = vmatprep.subr.mxu0 0.0
  %99 = vmatpush1.msra.mxu0 0.0
  %100 = vmatprep.subr.mxu0 0.0
  %101 = vmatpush1.msra.mxu0 0.0
  %102 = vmatprep.subr.mxu0 0.0
  %103 = vmatpush1.msra.mxu0 0.0
  %104 = vmatprep.subr.mxu0 0.0
  %105 = vmatpush1.msra.mxu0 0.0
  %106 = vmatprep.subr.mxu0 0.0
  %107 = vmatpush1.msra.mxu0 0.0
  %108 = vmatprep.subr.mxu0 0.0
  %109 = vmatpush1.msra.mxu0 0.0
  %110 = vmatprep.subr.mxu0 0.0
  %111 = vmatpush1.msra.mxu0 0.0
  %112 = vmatprep.subr.mxu0 0.0
  %113 = vmatpush1.msra.mxu0 0.0
  %114 = vmatprep.mubr.f32.mxu0 0.0
  %115 = vmatmul.mubr.f32.gmra.mrb[0].mxu0 %v35
  %v116 = vpop.f32.mrb[0].mxu0
  %v117 = vadd.f32 0.0, %v116
  %v118 = vpop.f32.mrb[0].mxu0
  %119 = vmatprep.mubr.f32.mxu0 0.0
  %120 = vmatmul.mubr.f32.gmra.mrb[0].mxu0 %v38
  %v121 = vpop.f32.mrb[0].mxu0
  %v122 = vadd.f32 0.0, %v121
  %v123 = vpop.f32.mrb[0].mxu0
  %124 = vmatprep.mubr.f32.mxu0 0.0
  %125 = vmatmul.mubr.f32.gmra.mrb[0].mxu0 %v41
  %v126 = vpop.f32.mrb[0].mxu0
  %v127 = vadd.f32 0.0, %v126
  %v128 = vpop.f32.mrb[0].mxu0
  %129 = vmatprep.mubr.f32.mxu0 0.0
  %130 = vmatmul.mubr.f32.gmra.mrb[0].mxu0 %v44
  %v131 = vpop.f32.mrb[0].mxu0
  %v132 = vadd.f32 0.0, %v131
  %v133 = vpop.f32.mrb[0].mxu0
  %134 = vdwg.mxu0
  %v135 = vld [vmem:[%s0] sm:$0xf]
  %v136 = vld [vmem:[%s0 + $0x4] sm:$0xf]
  %v137 = vunpack.c.l.bf16 %v135
  %v138 = vunpack.c.l.bf16 %v136
  %v139 = vmul.f32 %v137, %v117
  %v140 = vmul.f32 %v138, %v122
  %v141 = vadd.f32 %v139, %v127
  %v142 = vadd.f32 %v140, %v132
  %v143 = vmax.f32 %v141, 0.0
  %v144 = vmax.f32 %v142, 0.0
  %v145 = vadd.f32 %v17, %v143
  %v146 = vadd.f32 %v18, %v144
  %147 = vst [vmem:[%s4] sm:$0xff] %v145
  %148 = vst [vmem:[%s4 + $0x8] sm:$0xff] %v146
  // Predicated region
  $region18: #{_lambda_.7} parent=0 // pred_check
    _
  $region19: #{_lambda_.7} parent=0 // pred_check_branch
    %150 = sbr.rel (0) target = $region21
  $region20: #{_lambda_.7} parent=0 // pred_region
    _
  $region21: #{_lambda_.7} parent=0 // pred_fallthru
    _
  // Predicated region
  $region22: #{_lambda_.7} parent=0 // pred_check
    _
  $region23: #{_lambda_.7} parent=0 // pred_check_branch
    %152 = sbr.rel (0) target = $region25
  $region24: #{_lambda_.7} parent=0 // pred_region
    _
  $region25: #{_lambda_.7} parent=0 // pred_fallthru
    _

</llo_original>
